<compile_context>
chip_gen: v5e
topology: v5e:2x2
jax: 0.10.0
libtpu: 0.0.40
codegen_flags: <defaults>
</compile_context>

<pallas_src>
import jax
import jax.numpy as jnp
from jax.experimental import pallas as pl
from jax.experimental.pallas import tpu as pltpu


def _w2v_tile_kernel(m1_ref, m2_ref, lbl_ref, wgt_ref, out_ref):
    """One batch tile: m1/m2 are (D, TB) gathered rows, lbl/wgt/out are (1, TB)."""
    m1 = m1_ref[...].astype(jnp.float32)                      # (D, TB)
    m2 = m2_ref[...].astype(jnp.float32)                      # (D, TB)
    dp = m1 * m2                                              # (D, TB)

    # Reduce over the embedding dim (sublane axis) -> lane-dense (1, TB).
    pred = (jnp.mean(dp, axis=0, keepdims=True)
            - jnp.max(dp, axis=0, keepdims=True))             # (1, TB)
    pred = jnp.clip(pred, -20.0, 20.0)

    lbl = lbl_ref[...]                                        # (1, TB)
    # lbl*log(sigmoid(pred)) + (1-lbl)*log(1-sigmoid(pred)) == lbl*pred - softplus(pred)
    term = lbl * pred - jnp.log1p(jnp.exp(pred))              # (1, TB)

    # Zero out padded batch rows; per-row terms are summed in the wrapper.
    out_ref[...] = term * wgt_ref[...]


def word2vec_loss(center_id, other_id, label, w1_weight_t, w2_weight, *, tile_b=None):
    """Forward loss of the PyTorch `Model`.

    w1_weight_t: (wordsNum, embeddingDim) == torch W1.weight.T (one-time layout choice)
    w2_weight:   (wordsNum, embeddingDim) == torch W2.weight
    """
    B = center_id.shape[0]
    words_num, D = w1_weight_t.shape

    # Defensive clamp (XLA gather clamps OOB anyway; PyTorch would raise).
    cid = jnp.clip(center_id.astype(jnp.int32), 0, words_num - 1)
    oid = jnp.clip(other_id.astype(jnp.int32), 0, words_num - 1)

    if tile_b is None:
        tile_b = min(512, pl.cdiv(B, 128) * 128)   # multiple of 128 lanes
    b_pad = pl.cdiv(B, tile_b) * tile_b
    n_tiles = b_pad // tile_b
    pad = b_pad - B

    # Row gathers in the weights' native dtype (efficient XLA TPU gather of B
    # rows only), then transpose so the batch dim maps to lanes.
    mat1 = jnp.take(w1_weight_t, cid, axis=0).T               # (D, B) == mat1.T
    mat2 = jnp.take(w2_weight, oid, axis=0).T                 # (D, B) == mat2.T

    mat1 = jnp.pad(mat1, ((0, 0), (0, pad)))                  # (D, b_pad)
    mat2 = jnp.pad(mat2, ((0, 0), (0, pad)))                  # (D, b_pad)
    lbl = jnp.pad(label.astype(jnp.float32), (0, pad)).reshape(1, b_pad)
    wgt = jnp.pad(jnp.ones((B,), jnp.float32), (0, pad)).reshape(1, b_pad)

    terms = pl.pallas_call(
        _w2v_tile_kernel,
        out_shape=jax.ShapeDtypeStruct((1, b_pad), jnp.float32),
        grid_spec=pl.GridSpec(
            grid=(n_tiles,),
            in_specs=[
                pl.BlockSpec((D, tile_b), lambda i: (0, i)),   # gathered W1^T rows (transposed)
                pl.BlockSpec((D, tile_b), lambda i: (0, i)),   # gathered W2 rows (transposed)
                pl.BlockSpec((1, tile_b), lambda i: (0, i)),   # labels
                pl.BlockSpec((1, tile_b), lambda i: (0, i)),   # valid-row weights
            ],
            out_specs=pl.BlockSpec((1, tile_b), lambda i: (0, i)),
        ),
        compiler_params=pltpu.CompilerParams(
            dimension_semantics=("parallel",)),  # independent tiles -> megacore on v7x
    )(mat1, mat2, lbl, wgt)

    # One tiny reduce over B per-row terms (padded rows are already zeroed).
    return -jnp.sum(terms) / B


def word2vec_loss_ref(center_id, other_id, label, w1_weight, w2_weight):
    # Pure-JAX mirror of the PyTorch forward (torch weight layouts).
    mat1 = w1_weight.T[center_id]
    mat2 = w2_weight.T[:, other_id].T
    dp = mat1 * mat2
    pred = jnp.mean(dp, axis=-1) - jnp.max(dp, axis=-1)
    pred = jnp.clip(pred, -20.0, 20.0)
    p = 1.0 / (1.0 + jnp.exp(-pred))
    lbl = label.astype(jnp.float32)
    return -jnp.mean(lbl * jnp.log(p) + (1.0 - lbl) * jnp.log(1.0 - p))


if __name__ == "__main__":
    words_num, embedding_dim, batch = 64, 32, 8
    key = jax.random.PRNGKey(0)
    k1, k2, k3, k4, k5 = jax.random.split(key, 5)

    # Deterministic init mimicking nn.Linear default U(-1/sqrt(fan_in), 1/sqrt(fan_in)).
    b1 = 1.0 / float(words_num) ** 0.5
    b2 = 1.0 / float(embedding_dim) ** 0.5
    w1_weight = jax.random.uniform(k1, (embedding_dim, words_num), jnp.float32, -b1, b1)  # torch W1.weight
    w2_weight = jax.random.uniform(k2, (words_num, embedding_dim), jnp.float32, -b2, b2)  # torch W2.weight

    center_id = jax.random.randint(k3, (batch,), 0, words_num, dtype=jnp.int32)
    other_id = jax.random.randint(k4, (batch,), 0, words_num, dtype=jnp.int32)
    label = jax.random.bernoulli(k5, 0.5, (batch,)).astype(jnp.float32)

    # One-time parameter-layout transpose (kept outside the loss evaluation).
    w1_weight_t = w1_weight.T                                  # (wordsNum, embeddingDim)

    loss = jax.block_until_ready(
        word2vec_loss(center_id, other_id, label, w1_weight_t, w2_weight))
    ref = word2vec_loss_ref(center_id, other_id, label, w1_weight, w2_weight)
    assert jnp.allclose(loss, ref, rtol=1e-4, atol=1e-5), (loss, ref)
    print("KERNEL_OK")
</pallas_src>

<mosaic_0001>
module attributes {stable_mosaic.version = 11 : i64} {
  func.func @_w2v_tile_kernel(%arg0: i32, %arg1: memref<32x128xf32, #tpu.memory_space<vmem>>, %arg2: memref<32x128xf32, #tpu.memory_space<vmem>>, %arg3: memref<1x128xf32, #tpu.memory_space<vmem>>, %arg4: memref<1x128xf32, #tpu.memory_space<vmem>>, %arg5: memref<1x128xf32, #tpu.memory_space<vmem>>) attributes {dimension_semantics = [#tpu.dimension_semantics<parallel>], iteration_bounds = array<i64: 1>, scalar_prefetch = 0 : i64, scratch_operands = 0 : i64, tpu.core_type = #tpu.core_type<tc>, window_params = [{transform_indices = @transform_0, window_bounds = array<i64: 32, 128>}, {transform_indices = @transform_1, window_bounds = array<i64: 32, 128>}, {transform_indices = @transform_2, window_bounds = array<i64: 1, 128>}, {transform_indices = @transform_3, window_bounds = array<i64: 1, 128>}, {transform_indices = @transform_4, window_bounds = array<i64: 1, 128>}]} {
    %c0 = arith.constant 0 : index
    %c0_0 = arith.constant 0 : index
    %0 = vector.load %arg1[%c0, %c0_0] : memref<32x128xf32, #tpu.memory_space<vmem>>, vector<32x128xf32>
    %c0_1 = arith.constant 0 : index
    %c0_2 = arith.constant 0 : index
    %1 = vector.load %arg2[%c0_1, %c0_2] : memref<32x128xf32, #tpu.memory_space<vmem>>, vector<32x128xf32>
    %2 = arith.mulf %0, %1 : vector<32x128xf32>
    %cst = arith.constant dense<0.000000e+00> : vector<128xf32>
    %3 = vector.multi_reduction <add>, %2, %cst [0] : vector<32x128xf32> to vector<128xf32>
    %4 = vector.shape_cast %3 : vector<128xf32> to vector<1x128xf32>
    %cst_3 = arith.constant 3.200000e+01 : f32
    %5 = vector.broadcast %cst_3 : f32 to vector<1x128xf32>
    %6 = arith.divf %4, %5 : vector<1x128xf32>
    %cst_4 = arith.constant dense<0xFF800000> : vector<128xf32>
    %7 = vector.multi_reduction <maximumf>, %2, %cst_4 [0] : vector<32x128xf32> to vector<128xf32>
    %8 = vector.shape_cast %7 : vector<128xf32> to vector<1x128xf32>
    %9 = arith.subf %6, %8 : vector<1x128xf32>
    %cst_5 = arith.constant -2.000000e+01 : f32
    %cst_6 = arith.constant 2.000000e+01 : f32
    %10 = vector.broadcast %cst_5 : f32 to vector<1x128xf32>
    %11 = arith.maximumf %10, %9 : vector<1x128xf32>
    %12 = vector.broadcast %cst_6 : f32 to vector<1x128xf32>
    %13 = arith.minimumf %12, %11 : vector<1x128xf32>
    %c0_7 = arith.constant 0 : index
    %c0_8 = arith.constant 0 : index
    %14 = vector.load %arg3[%c0_7, %c0_8] : memref<1x128xf32, #tpu.memory_space<vmem>>, vector<1x128xf32>
    %15 = arith.mulf %14, %13 : vector<1x128xf32>
    %16 = math.exp %13 : vector<1x128xf32>
    %17 = math.log1p %16 : vector<1x128xf32>
    %18 = arith.subf %15, %17 : vector<1x128xf32>
    %c0_9 = arith.constant 0 : index
    %c0_10 = arith.constant 0 : index
    %19 = vector.load %arg4[%c0_9, %c0_10] : memref<1x128xf32, #tpu.memory_space<vmem>>, vector<1x128xf32>
    %20 = arith.mulf %18, %19 : vector<1x128xf32>
    %c0_11 = arith.constant 0 : index
    %c0_12 = arith.constant 0 : index
    %21 = vector.load %arg5[%c0_11, %c0_12] : memref<1x128xf32, #tpu.memory_space<vmem>>, vector<1x128xf32>
    tpu.vector_store %arg5[%c0_11, %c0_12], %20 {strides = array<i32>} : memref<1x128xf32, #tpu.memory_space<vmem>>, vector<1x128xf32>,
    return
  }
  func.func @transform_0(%arg0: i32) -> (i32, i32) {
    %c0_i32 = arith.constant 0 : i32
    %c0_i32_0 = arith.constant 0 : i32
    return %c0_i32, %arg0 : i32, i32
  }
  func.func @transform_1(%arg0: i32) -> (i32, i32) {
    %c0_i32 = arith.constant 0 : i32
    %c0_i32_0 = arith.constant 0 : i32
    return %c0_i32, %arg0 : i32, i32
  }
  func.func @transform_2(%arg0: i32) -> (i32, i32) {
    %c0_i32 = arith.constant 0 : i32
    %c0_i32_0 = arith.constant 0 : i32
    return %c0_i32, %arg0 : i32, i32
  }
  func.func @transform_3(%arg0: i32) -> (i32, i32) {
    %c0_i32 = arith.constant 0 : i32
    %c0_i32_0 = arith.constant 0 : i32
    return %c0_i32, %arg0 : i32, i32
  }
  func.func @transform_4(%arg0: i32) -> (i32, i32) {
    %c0_i32 = arith.constant 0 : i32
    %c0_i32_0 = arith.constant 0 : i32
    return %c0_i32, %arg0 : i32, i32
  }
}

</mosaic_0001>

<llo_original>
// kernel: tpu_custom_call.1
$region0: #{tpu_custom_call.1}
  #allocation0 [shape = 'u32[]', space=smem, size = 0x4, offset = 0x4, fixed_abs, tag = 'smem constant byte address 0x4 - core index']
  #allocation1 [shape = 'u32[72,128]{1,0:T(1,128)}', space=vmem, size = 0x9000, scoped, tag = 'internal scratch']
  %s0 = inlined_call_operand.hbm [shape: f32[32,128], index: 0, kind: input, shape index: {}]
  %s1 = inlined_call_operand.hbm [shape: f32[32,128], index: 1, kind: input, shape index: {}]
  %s2 = inlined_call_operand.vmem [shape: f32[1,128], index: 2, kind: input, shape index: {}]
  %s3 = inlined_call_operand.vmem [shape: f32[1,128], index: 3, kind: input, shape index: {}]
  %s4 = inlined_call_operand.hbm [shape: f32[1,128], index: 4, kind: output, shape index: {}]
  %s5 = sld [smem:[#allocation0]]
  $region34: #{tpu_custom_call.1} parent=0
    _
  %s7 = ssub.s32 1, %s5
  %s8 = scalar_select 0, %s7, %s5
  $region1: #{tpu_custom_call.1} parent=0
    #allocation2 [shape = 'u8[16384]{0}', space=vmem, size = 0x4000, scoped, tag = 'input window, operand 0, single buffered']
    #allocation3 [shape = 's32[1]{0}', space=sflag, size = 0x4, scoped, tag = 'scoped memory for tpu_custom_call.1']
    #allocation4 [shape = 's32[1]{0}', space=sflag, size = 0x4, scoped, tag = 'scoped memory for tpu_custom_call.1']
    #allocation5 [shape = 'u8[16384]{0}', space=vmem, size = 0x4000, scoped, tag = 'input window, operand 1, single buffered']
    #allocation6 [shape = 's32[1]{0}', space=sflag, size = 0x4, scoped, tag = 'scoped memory for tpu_custom_call.1']
    #allocation7 [shape = 'u8[512]{0}', space=vmem, size = 0x400, scoped, tag = 'output window, operand 0, single buffered']
    %9 = vsyncpa [#allocation3], 0
    %10 = vsyncpa [#allocation6], 0
    %11 = vsyncpa [#allocation4], 0
    // Predicated region
    $region2: #{tpu_custom_call.1} parent=1 // pred_check
      _
    $region3: #{tpu_custom_call.1} parent=1 // pred_check_branch
      %13 = sbr.rel (0) target = $region5
    $region4: #{tpu_custom_call.1} parent=1 // pred_region
      %15 = vsyncadd [#allocation3], 0
      %s16 = sshll.u32 %s0, 4
      %s17 = int_to_ptr.hbm [resolvable:$true] %s16
      %s18 = sshll.u32 [#allocation2], 4
      %s19 = int_to_ptr.vmem [resolvable:$true] %s18
      %24 = dma.hbm_to_vmem [thread:$0]  %s17, 512, %s19, [#allocation3], 128, 128, 8
    $region5: #{tpu_custom_call.1} parent=1 // pred_fallthru
      _
    // Predicated region
    $region6: #{tpu_custom_call.1} parent=1 // pred_check
      _
    $region7: #{tpu_custom_call.1} parent=1 // pred_check_branch
      %26 = sbr.rel (0) target = $region9
    $region8: #{tpu_custom_call.1} parent=1 // pred_region
      %28 = vsyncadd [#allocation6], 0
      %s29 = sshll.u32 %s1, 4
      %s30 = int_to_ptr.hbm [resolvable:$true] %s29
      %s31 = sshll.u32 [#allocation5], 4
      %s32 = int_to_ptr.vmem [resolvable:$true] %s31
      %37 = dma.hbm_to_vmem [thread:$0]  %s30, 512, %s32, [#allocation6], 128, 128, 8
    $region9: #{tpu_custom_call.1} parent=1 // pred_fallthru
      _
    // Predicated region
    $region10: #{tpu_custom_call.1} parent=1 // pred_check
      _
    $region11: #{tpu_custom_call.1} parent=1 // pred_check_branch
      %39 = sbr.rel (0) target = $region13
    $region12: #{tpu_custom_call.1} parent=1 // pred_region
      _
    $region13: #{tpu_custom_call.1} parent=1 // pred_fallthru
      _
    // Predicated region
    $region14: #{tpu_custom_call.1} parent=1 // pred_check
      _
    $region15: #{tpu_custom_call.1} parent=1 // pred_check_branch
      %41 = sbr.rel (0) target = $region17
    $region16: #{tpu_custom_call.1} parent=1 // pred_region
      _
    $region17: #{tpu_custom_call.1} parent=1 // pred_fallthru
      _
    // Predicated region
    $region18: #{tpu_custom_call.1} parent=1 // pred_check
      _
    $region19: #{tpu_custom_call.1} parent=1 // pred_check_branch
      %43 = sbr.rel (0) target = $region21
    $region20: #{tpu_custom_call.1} parent=1 // pred_region
      %45 = dma.done [#allocation3], 512
    $region21: #{tpu_custom_call.1} parent=1 // pred_fallthru
      _
    // Predicated region
    $region22: #{tpu_custom_call.1} parent=1 // pred_check
      _
    $region23: #{tpu_custom_call.1} parent=1 // pred_check_branch
      %47 = sbr.rel (0) target = $region25
    $region24: #{tpu_custom_call.1} parent=1 // pred_region
      %49 = dma.done [#allocation6], 512
    $region25: #{tpu_custom_call.1} parent=1 // pred_fallthru
      _
    %v50 = vld [vmem:[#allocation2] sm:$0xff]
    %v51 = vld [vmem:[#allocation2 + $0x8] sm:$0xff]
    %v52 = vld [vmem:[#allocation2 + $0x10] sm:$0xff]
    %v53 = vld [vmem:[#allocation2 + $0x18] sm:$0xff]
    %v54 = vld [vmem:[#allocation5] sm:$0xff]
    %v55 = vld [vmem:[#allocation5 + $0x8] sm:$0xff]
    %v56 = vld [vmem:[#allocation5 + $0x10] sm:$0xff]
    %v57 = vld [vmem:[#allocation5 + $0x18] sm:$0xff]
    %v58 = vmul.f32 %v50, %v54
    %v59 = vmul.f32 %v51, %v55
    %v60 = vmul.f32 %v52, %v56
    %v61 = vmul.f32 %v53, %v57
    %v62 = vadd.f32 %v58, %v59
    %v63 = vadd.f32 %v62, %v60
    %v64 = vadd.f32 %v63, %v61
    %v65 = vrot.slane %v64, 4
    %v66 = vadd.f32 %v64, %v65
    %v67 = vrot.slane %v66, 2
    %v68 = vadd.f32 %v66, %v67
    %v69 = vrot.slane %v68, 1
    %v70 = vadd.f32 %v68, %v69
    %v71 = vrcp.pop 32.0
    %v72 = vmul.f32 32.0, %v71
    %v73 = vsub.f32 1.0, %v72
    %v74 = vmul.f32 %v71, %v73
    %v75 = vadd.f32 %v71, %v74
    %vm76 = vweird.f32 %v71
    %v77 = vsel %vm76, %v71, %v75
    %v78 = vmul.f32 %v70, %v77
    %v79 = vmax.f32 %v58, %v59
    %v80 = vmax.f32 %v60, %v61
    %v81 = vmax.f32 %v79, %v80
    %v82 = vrot.slane %v81, 4
    %v83 = vmax.f32 %v81, %v82
    %v84 = vrot.slane %v83, 2
    %v85 = vmax.f32 %v83, %v84
    %v86 = vrot.slane %v85, 1
    %v87 = vmax.f32 %v85, %v86
    %v88 = vsub.f32 %v78, %v87
    %v89 = vmax.f32 %v88, -20.0
    %v90 = vmin.f32 %v89, 20.0
    %v91 = vld [vmem:[%s2] sm:$0x1]
    %v92 = vmul.f32 %v91, %v90
    %v93 = vmul.f32 %v90, 1.442695
    %v94 = vpow.pop %v93
    %v95 = vadd.f32 %v94, 1.0
    %v96 = vlog2.pop %v95
    %v97 = vmul.f32 %v96, 0.6931472
    %v98 = vmul.f32 -0.5, %v94
    %v99 = vadd.f32 %v98, 1.0
    %v100 = vmul.f32 %v99, %v94
    %v101 = vand.u32 2147483647, %v94
    %vm102 = vcmp.lt.f32.partialorder %v101, 0.0004427343
    %v103 = vsel %vm102, %v100, %v97
    %v104 = vsub.f32 %v92, %v103
    %v105 = vld [vmem:[%s3] sm:$0x1]
    %v106 = vmul.f32 %v104, %v105
    %107 = vst [vmem:[#allocation7] sm:$0x1] %v106
    // Predicated region
    $region26: #{tpu_custom_call.1} parent=1 // pred_check
      _
    $region27: #{tpu_custom_call.1} parent=1 // pred_check_branch
      %109 = sbr.rel (0) target = $region29
    $region28: #{tpu_custom_call.1} parent=1 // pred_region
      %111 = vsyncadd [#allocation4], 0
      %s113 = sshll.u32 [#allocation7], 4
      %s114 = int_to_ptr.vmem [resolvable:$true] %s113
      %s115 = sshll.u32 %s4, 4
      %s116 = int_to_ptr.hbm [resolvable:$true] %s115
      %118 = dma.vmem_to_hbm [thread:$0]  %s114, 16, %s116, [#allocation4]
    $region29: #{tpu_custom_call.1} parent=1 // pred_fallthru
      _
    // Predicated region
    $region30: #{tpu_custom_call.1} parent=1 // pred_check
      _
    $region31: #{tpu_custom_call.1} parent=1 // pred_check_branch
      %120 = sbr.rel (0) target = $region33
    $region32: #{tpu_custom_call.1} parent=1 // pred_region
      %122 = dma.done [#allocation4], 16
    $region33: #{tpu_custom_call.1} parent=1 // pred_fallthru
      _
    %123 = vsyncpa [#allocation3], 1
    %124 = vsyncpa [#allocation6], 1
    %125 = vsyncpa [#allocation4], 1

</llo_original>
